<compile_context>
chip_gen: v7x
topology: tpu7x:2x2x1
jax: 0.10.0
libtpu: 0.0.40
codegen_flags: <defaults>
</compile_context>

<pallas_src>
import functools

import jax
import jax.numpy as jnp
from jax.experimental import pallas as pl
from jax.experimental.pallas import tpu as pltpu

# Small, TPU-friendly stand-in for GPT_CONFIG_124M (same structure, tiny sizes).
CFG = {
    "vocab_size": 256,
    "context_length": 64,
    "embed_dim": 128,
    "n_heads": 4,
    "n_layers": 2,
    "drop_rate": 0.1,
    "qkv_bias": False,
}


# ---------------------------------------------------------------------------
# Fused kernel: embedding gather + positional add + LM-head matmul
# ---------------------------------------------------------------------------
def _fused_kernel(B, S, ids_ref, tok_ref, pos_ref, w_ref, out_ref):
    """ids_ref : VMEM (BS, 1) int32  -- flattened token ids (batch-major)
       tok_ref : VMEM (V, D)  f32    -- full token-embedding table (resident, toy size)
       pos_ref : VMEM (C, D)  f32    -- full positional-embedding table (resident)
       w_ref   : VMEM (D, tn) bf16   -- one vocab tile of the transposed LM head
       out_ref : VMEM (BS, tn) f32   -- logits tile
    """
    V, D = tok_ref.shape
    BS = B * S

    # --- token-embedding gather, vectorized on the MXU ---------------------
    # Clamp ids so an out-of-range token can never read adjacent VMEM.
    ids = jnp.clip(ids_ref[...], 0, V - 1)                      # (BS, 1) int32
    vocab_iota = jax.lax.broadcasted_iota(jnp.int32, (BS, V), 1)
    one_hot = (vocab_iota == ids).astype(jnp.bfloat16)          # (BS, V)
    tok = jnp.dot(one_hot, tok_ref[...].astype(jnp.bfloat16),
                  preferred_element_type=jnp.float32)           # (BS, D) f32

    # --- positional add: first S rows, tiled across the batch --------------
    pos_s = pos_ref[0:S, :]                                     # (S, D) f32, static slice
    pos = jnp.concatenate([pos_s] * B, axis=0)                  # (BS, D) f32

    # Single f32 -> bf16 cast of the whole block, right before the matmul.
    # (bf16 operands diverge from the f32 PyTorch module by ~1e-3; acceptable
    #  and documented for this dummy model.)
    h = (tok + pos).astype(jnp.bfloat16)                        # (BS, D) bf16

    # dropout (eval), DummyTransformerBlock, DummyLayerNorm: identities.
    # TODO(synk): stochastic train-mode dropout omitted (eval-mode identity).

    # --- LM head: bf16 x bf16 -> f32 accumulation on the MXU ---------------
    out_ref[...] = jnp.dot(h, w_ref[...], preferred_element_type=jnp.float32)


def dummy_gpt_forward(x_ids, params, cfg, tn=2048):
    B, S = x_ids.shape
    V, D = params["tok_emb"].shape
    C = params["pos_emb"].shape[0]
    BS = B * S
    assert S <= C

    tn = min(tn, V)
    assert V % tn == 0 and tn % 128 == 0

    ids = x_ids.reshape(BS, 1).astype(jnp.int32)

    grid_spec = pltpu.PrefetchScalarGridSpec(
        num_scalar_prefetch=0,
        grid=(V // tn,),
        in_specs=[
            pl.BlockSpec((BS, 1), lambda j: (0, 0)),   # token ids (grid-invariant)
            pl.BlockSpec((V, D), lambda j: (0, 0)),    # whole token table (toy size)
            pl.BlockSpec((C, D), lambda j: (0, 0)),    # whole positional table
            pl.BlockSpec((D, tn), lambda j: (0, j)),   # vocab tile of W^T (streamed)
        ],
        out_specs=pl.BlockSpec((BS, tn), lambda j: (0, j)),
    )

    logits = pl.pallas_call(
        functools.partial(_fused_kernel, B, S),
        out_shape=jax.ShapeDtypeStruct((BS, V), jnp.float32),
        grid_spec=grid_spec,
        # No cross-step carry anymore -> the vocab sweep is embarrassingly
        # parallel and can be split across both v7x TensorCores.
        compiler_params=pltpu.CompilerParams(
            dimension_semantics=("parallel",)),
    )(ids, params["tok_emb"], params["pos_emb"], params["out_w_t"])

    return logits.reshape(B, S, V)


# ---------------------------------------------------------------------------
# Parameters (deterministic, __init__ shapes)
# ---------------------------------------------------------------------------
def init_params(cfg, key):
    k_tok, k_pos, k_out = jax.random.split(key, 3)
    V, C, D = cfg["vocab_size"], cfg["context_length"], cfg["embed_dim"]
    tok_emb = jax.random.normal(k_tok, (V, D), jnp.float32)              # nn.Embedding(V, D)
    pos_emb = jax.random.normal(k_pos, (C, D), jnp.float32)              # nn.Embedding(C, D)
    out_w = jax.random.normal(k_out, (V, D), jnp.float32) / jnp.sqrt(D)  # nn.Linear(D, V, bias=False)
    return {
        "tok_emb": tok_emb,
        "pos_emb": pos_emb,
        # stored transposed + bf16: native MXU operand (f32 accumulation in-kernel)
        "out_w_t": out_w.T.astype(jnp.bfloat16),
    }


if __name__ == "__main__":
    key = jax.random.PRNGKey(0)
    k_params, k_ids = jax.random.split(key)

    B, S = 2, 8
    params = init_params(CFG, k_params)
    x_ids = jax.random.randint(k_ids, (B, S), 0, CFG["vocab_size"], jnp.int32)

    # tn=128 -> grid=(2,): exercises the tiled vocab sweep even at toy size.
    logits = jax.block_until_ready(dummy_gpt_forward(x_ids, params, CFG, tn=128))

    # pure-JAX reference following the same bf16-operand / f32-accumulate path
    tok_bf = params["tok_emb"].astype(jnp.bfloat16).astype(jnp.float32)
    h = jnp.take(tok_bf, x_ids, axis=0) + params["pos_emb"][:S][None, :, :]
    ref = jnp.dot(h.reshape(B * S, -1).astype(jnp.bfloat16),
                  params["out_w_t"],
                  preferred_element_type=jnp.float32
                  ).reshape(B, S, CFG["vocab_size"])

    assert logits.shape == (B, S, CFG["vocab_size"])
    assert jnp.allclose(logits, ref, atol=1e-3, rtol=1e-3), \
        float(jnp.max(jnp.abs(logits - ref)))

    print("KERNEL_OK")
</pallas_src>

<mosaic_0001>
module attributes {stable_mosaic.version = 11 : i64} {
  func.func @_fused_kernel(%arg0: i32, %arg1: memref<16x1xi32, #tpu.memory_space<vmem>>, %arg2: memref<256x128xf32, #tpu.memory_space<vmem>>, %arg3: memref<64x128xf32, #tpu.memory_space<vmem>>, %arg4: memref<128x128xbf16, #tpu.memory_space<vmem>>, %arg5: memref<16x128xf32, #tpu.memory_space<vmem>>) attributes {dimension_semantics = [#tpu.dimension_semantics<parallel>], iteration_bounds = array<i64: 2>, scalar_prefetch = 0 : i64, scratch_operands = 0 : i64, tpu.core_type = #tpu.core_type<tc>, window_params = [{pipeline_mode = #tpu.pipeline_mode<synchronous>, transform_indices = @transform_0, window_bounds = array<i64: 16, 1>}, {pipeline_mode = #tpu.pipeline_mode<synchronous>, transform_indices = @transform_1, window_bounds = array<i64: 256, 128>}, {pipeline_mode = #tpu.pipeline_mode<synchronous>, transform_indices = @transform_2, window_bounds = array<i64: 64, 128>}, {transform_indices = @transform_3, window_bounds = array<i64: 128, 128>}, {transform_indices = @transform_4, window_bounds = array<i64: 16, 128>}]} {
    %c0 = arith.constant 0 : index
    %c0_0 = arith.constant 0 : index
    %0 = vector.load %arg1[%c0, %c0_0] : memref<16x1xi32, #tpu.memory_space<vmem>>, vector<16x1xi32>
    %c0_i32 = arith.constant 0 : i32
    %c255_i32 = arith.constant 255 : i32
    %1 = vector.broadcast %c0_i32 : i32 to vector<16x1xi32>
    %2 = arith.maxsi %1, %0 : vector<16x1xi32>
    %3 = vector.broadcast %c255_i32 : i32 to vector<16x1xi32>
    %4 = arith.minsi %3, %2 : vector<16x1xi32>
    %5 = tpu.iota {dimensions = array<i32: 1>} : vector<16x256xi32>
    %6 = vector.broadcast %4 : vector<16x1xi32> to vector<16x256xi32>
    %7 = arith.cmpi eq, %5, %6 : vector<16x256xi32>
    %8 = arith.extui %7 : vector<16x256xi1> to vector<16x256xi32>
    %9 = arith.sitofp %8 : vector<16x256xi32> to vector<16x256xf32>
    %10 = arith.truncf %9 : vector<16x256xf32> to vector<16x256xbf16>
    %c0_1 = arith.constant 0 : index
    %c0_2 = arith.constant 0 : index
    %11 = vector.load %arg2[%c0_1, %c0_2] : memref<256x128xf32, #tpu.memory_space<vmem>>, vector<256x128xf32>
    %12 = arith.truncf %11 : vector<256x128xf32> to vector<256x128xbf16>
    %cst = arith.constant dense<0.000000e+00> : vector<16x128xf32>
    %13 = tpu.matmul %10, %12, %cst {dimension_numbers = #tpu.dot_dimension_numbers<[1], [0], [0], [1], [0, 0, 1, 1], [], []>} : vector<16x256xbf16>, vector<256x128xbf16>, vector<16x128xf32> -> vector<16x128xf32>
    %c0_3 = arith.constant 0 : index
    %c0_4 = arith.constant 0 : index
    %14 = vector.load %arg3[%c0_3, %c0_4] : memref<64x128xf32, #tpu.memory_space<vmem>>, vector<8x128xf32>
    %15 = tpu.concatenate %14, %14 in 0 : vector<8x128xf32>, vector<8x128xf32> -> vector<16x128xf32>
    %16 = arith.addf %13, %15 : vector<16x128xf32>
    %17 = arith.truncf %16 : vector<16x128xf32> to vector<16x128xbf16>
    %c0_5 = arith.constant 0 : index
    %c0_6 = arith.constant 0 : index
    %18 = vector.load %arg4[%c0_5, %c0_6] : memref<128x128xbf16, #tpu.memory_space<vmem>>, vector<128x128xbf16>
    %cst_7 = arith.constant dense<0.000000e+00> : vector<16x128xf32>
    %19 = tpu.matmul %17, %18, %cst_7 {dimension_numbers = #tpu.dot_dimension_numbers<[1], [0], [0], [1], [0, 0, 1, 1], [], []>} : vector<16x128xbf16>, vector<128x128xbf16>, vector<16x128xf32> -> vector<16x128xf32>
    %c0_8 = arith.constant 0 : index
    %c0_9 = arith.constant 0 : index
    %20 = vector.load %arg5[%c0_8, %c0_9] : memref<16x128xf32, #tpu.memory_space<vmem>>, vector<16x128xf32>
    tpu.vector_store %arg5[%c0_8, %c0_9], %19 {strides = array<i32>} : memref<16x128xf32, #tpu.memory_space<vmem>>, vector<16x128xf32>,
    return
  }
  func.func @transform_0(%arg0: i32) -> (i32, i32) {
    %c0_i32 = arith.constant 0 : i32
    %c0_i32_0 = arith.constant 0 : i32
    %c0_i32_1 = arith.constant 0 : i32
    return %c0_i32, %c0_i32_0 : i32, i32
  }
  func.func @transform_1(%arg0: i32) -> (i32, i32) {
    %c0_i32 = arith.constant 0 : i32
    %c0_i32_0 = arith.constant 0 : i32
    %c0_i32_1 = arith.constant 0 : i32
    return %c0_i32, %c0_i32_0 : i32, i32
  }
  func.func @transform_2(%arg0: i32) -> (i32, i32) {
    %c0_i32 = arith.constant 0 : i32
    %c0_i32_0 = arith.constant 0 : i32
    %c0_i32_1 = arith.constant 0 : i32
    return %c0_i32, %c0_i32_0 : i32, i32
  }
  func.func @transform_3(%arg0: i32) -> (i32, i32) {
    %c0_i32 = arith.constant 0 : i32
    %c0_i32_0 = arith.constant 0 : i32
    return %c0_i32, %arg0 : i32, i32
  }
  func.func @transform_4(%arg0: i32) -> (i32, i32) {
    %c0_i32 = arith.constant 0 : i32
    %c0_i32_0 = arith.constant 0 : i32
    return %c0_i32, %arg0 : i32, i32
  }
}

</mosaic_0001>

<llo_original>
// kernel: tpu_custom_call.1
$region0: #{tpu_custom_call.1}
  #allocation0 [shape = 'u32[]', space=smem, size = 0x4, offset = 0x4, fixed_abs, tag = 'smem constant byte address 0x4 - core index']
  #allocation1 [shape = 'u32[144,128]{1,0:T(1,128)}', space=vmem, size = 0x12000, scoped, tag = 'internal scratch']
  %s0 = inlined_call_operand.vmem [shape: s32[16,1], index: 0, kind: input, shape index: {}]
  %s1 = inlined_call_operand.hbm [shape: f32[256,128], index: 1, kind: input, shape index: {}]
  %s2 = inlined_call_operand.hbm [shape: f32[64,128], index: 2, kind: input, shape index: {}]
  %s3 = inlined_call_operand.hbm [shape: bf16[128,256], index: 3, kind: input, shape index: {}]
  %s4 = inlined_call_operand.hbm [shape: f32[16,256], index: 4, kind: output, shape index: {}]
  %s5 = sld [smem:[#allocation0]]
  $region61: #{tpu_custom_call.1} parent=0
    _
  %s7 = ssub.s32 1, %s5
  %s8 = scalar_select 0, %s7, %s5
  $region1: #{tpu_custom_call.1} parent=0
    #allocation2 [shape = 'u8[131072]{0}', space=vmem, size = 0x20000, scoped, tag = 'input window, operand 1, single buffered']
    #allocation3 [shape = 's32[2]{0}', space=sflag, size = 0x8, scoped, tag = 'scoped memory for tpu_custom_call.1']
    #allocation4 [shape = 's32[2]{0}', space=sflag, size = 0x8, scoped, tag = 'scoped memory for tpu_custom_call.1']
    #allocation5 [shape = 'u8[32768]{0}', space=vmem, size = 0x8000, scoped, tag = 'input window, operand 2, single buffered']
    #allocation6 [shape = 's32[1]{0}', space=sflag, size = 0x4, scoped, tag = 'scoped memory for tpu_custom_call.1']
    #allocation7 [shape = 'u8[65536]{0}', space=vmem, size = 0x10000, scoped, tag = 'input window, operand 3']
    #allocation8 [shape = 'u8[16384]{0}', space=vmem, size = 0x4000, scoped, tag = 'output window, operand 0']
    %9 = vsyncpa [#allocation3], 0
    %10 = vsyncpa [#allocation6], 0
    %11 = vsyncpa [#allocation4], 0
    %s12 = scalar_lea.sflag [#allocation4], 1
    %13 = vsyncpa %s12, 0
    loop: start=0, step=1, limit=4
    $region2: #{tpu_custom_call.1} parent=1 // loop_pre_header
      _
    $region3: #{tpu_custom_call.1} parent=1 // loop_header
      %s15 = sphi 0, %s19
      %p16 = scmp.ge.s32.totalorder %s15, 4
      %s23 = sphi 0, %s23
      %s25 = sphi 0, %s23
      %s26 = sphi 0, %s25
      %s40 = sphi 0, %s26
      %s44 = sphi 0, %s44
      %s46 = sphi 0, %s44
      %s47 = sphi 0, %s46
      %s61 = sphi 0, %s47
      %s65 = sphi 0, %s65
      %s67 = sphi 0, %s65
      %s68 = sphi 0, %s67
      %s82 = sphi 0, %s68
      %s88 = sphi 0, %s90
      %s91 = sphi 0, %s88
      %s92 = sphi 0, %s91
      %s108 = sphi 0, %s92
      %s114 = sphi 0, %s116
      %s117 = sphi 0, %s114
      %s118 = sphi 0, %s117
      %s134 = sphi 0, %s118
    $region4: #{tpu_custom_call.1} parent=1 // loop_header_branch
      %18 = sbr.rel (%p16) target = $region8
    $region5: #{tpu_custom_call.1} parent=1 // loop_body
      %s20 = ssub.s32 %s15, 1
      %s21 = ssub.s32 %s15, 2
      %s22 = sadd.s32 %s15, 1
      %s24 = sadd.s32 %s23, 1
      %p27 = scmp.eq.s32.totalorder %s15, 1
      %p28 = scmp.ne.s32.totalorder %s23, %s25
      %p29 = scmp.eq.s32.totalorder %s15, 0
      %p30 = por %p28, %p29
      %p31 = scmp.ne.s32.totalorder %s23, %s25
      %p32 = scmp.eq.s32.totalorder %s20, 1
      %p33 = por %p31, %p32
      %p34 = scmp.ne.s32.totalorder %s25, %s26
      %p35 = scmp.eq.s32.totalorder %s20, 0
      %p36 = por %p34, %p35
      %p37 = scmp.ne.s32.totalorder %s25, %s26
      %p38 = scmp.eq.s32.totalorder %s21, 1
      %p39 = por %p37, %p38
      %p41 = scmp.ne.s32.totalorder %s26, %s40
      %p42 = scmp.eq.s32.totalorder %s21, 0
      %p43 = por %p41, %p42
      %s45 = sadd.s32 %s44, 1
      %p48 = scmp.eq.s32.totalorder %s15, 1
      %p49 = scmp.ne.s32.totalorder %s44, %s46
      %p50 = scmp.eq.s32.totalorder %s15, 0
      %p51 = por %p49, %p50
      %p52 = scmp.ne.s32.totalorder %s44, %s46
      %p53 = scmp.eq.s32.totalorder %s20, 1
      %p54 = por %p52, %p53
      %p55 = scmp.ne.s32.totalorder %s46, %s47
      %p56 = scmp.eq.s32.totalorder %s20, 0
      %p57 = por %p55, %p56
      %p58 = scmp.ne.s32.totalorder %s46, %s47
      %p59 = scmp.eq.s32.totalorder %s21, 1
      %p60 = por %p58, %p59
      %p62 = scmp.ne.s32.totalorder %s47, %s61
      %p63 = scmp.eq.s32.totalorder %s21, 0
      %p64 = por %p62, %p63
      %s66 = sadd.s32 %s65, 1
      %p69 = scmp.eq.s32.totalorder %s15, 1
      %p70 = scmp.ne.s32.totalorder %s65, %s67
      %p71 = scmp.eq.s32.totalorder %s15, 0
      %p72 = por %p70, %p71
      %p73 = scmp.ne.s32.totalorder %s65, %s67
      %p74 = scmp.eq.s32.totalorder %s20, 1
      %p75 = por %p73, %p74
      %p76 = scmp.ne.s32.totalorder %s67, %s68
      %p77 = scmp.eq.s32.totalorder %s20, 0
      %p78 = por %p76, %p77
      %p79 = scmp.ne.s32.totalorder %s67, %s68
      %p80 = scmp.eq.s32.totalorder %s21, 1
      %p81 = por %p79, %p80
      %p83 = scmp.ne.s32.totalorder %s68, %s82
      %p84 = scmp.eq.s32.totalorder %s21, 0
      %p85 = por %p83, %p84
      %s86 = ssub.s32 %s15, %s22
      %p87 = scmp.eq.s32.totalorder %s86, 0
      %s89 = sadd.s32 %s88, 1
      %s90 = scalar_select %p87, %s88, %s89
      %p93 = pneg %p87
      %p94 = scmp.eq.s32.totalorder %s15, 1
      %p95 = por %p93, %p94
      %p96 = scmp.ne.s32.totalorder %s88, %s91
      %p97 = scmp.eq.s32.totalorder %s15, 0
      %p98 = por %p96, %p97
      %p99 = scmp.ne.s32.totalorder %s88, %s91
      %p100 = scmp.eq.s32.totalorder %s20, 1
      %p101 = por %p99, %p100
      %p102 = scmp.ne.s32.totalorder %s91, %s92
      %p103 = scmp.eq.s32.totalorder %s20, 0
      %p104 = por %p102, %p103
      %p105 = scmp.ne.s32.totalorder %s91, %s92
      %p106 = scmp.eq.s32.totalorder %s21, 1
      %p107 = por %p105, %p106
      %p109 = scmp.ne.s32.totalorder %s92, %s108
      %p110 = scmp.eq.s32.totalorder %s21, 0
      %p111 = por %p109, %p110
      %s112 = ssub.s32 %s15, %s22
      %p113 = scmp.eq.s32.totalorder %s112, 0
      %s115 = sadd.s32 %s114, 1
      %s116 = scalar_select %p113, %s114, %s115
      %p119 = pneg %p113
      %p120 = scmp.eq.s32.totalorder %s15, 1
      %p121 = por %p119, %p120
      %p122 = scmp.ne.s32.totalorder %s114, %s117
      %p123 = scmp.eq.s32.totalorder %s15, 0
      %p124 = por %p122, %p123
      %p125 = scmp.ne.s32.totalorder %s114, %s117
      %p126 = scmp.eq.s32.totalorder %s20, 1
      %p127 = por %p125, %p126
      %p128 = scmp.ne.s32.totalorder %s117, %s118
      %p129 = scmp.eq.s32.totalorder %s20, 0
      %p130 = por %p128, %p129
      %p131 = scmp.ne.s32.totalorder %s117, %s118
      %p132 = scmp.eq.s32.totalorder %s21, 1
      %p133 = por %p131, %p132
      %p135 = scmp.ne.s32.totalorder %s118, %s134
      %p136 = scmp.eq.s32.totalorder %s21, 0
      %p137 = por %p135, %p136
      %p138 = scmp.le.s32.totalorder 1, %s15
      %p139 = scmp.lt.s32.totalorder %s15, 3
      %p140 = pnand %p138, %p139
      %p141 = pneg %p140
      // Predicated region
      $region9: #{tpu_custom_call.1} parent=5 // pred_check
        _
      $region10: #{tpu_custom_call.1} parent=5 // pred_check_branch
        %143 = sbr.rel (%p140) target = $region12
      $region11: #{tpu_custom_call.1} parent=5 // pred_region
        %s144 = ssub.s32 %s15, 1
        // Predicated region
        $region13: #{tpu_custom_call.1} parent=11 // pred_check
          %p145 = pneg %p36
        $region14: #{tpu_custom_call.1} parent=11 // pred_check_branch
          %147 = sbr.rel (%p145) target = $region16
        $region15: #{tpu_custom_call.1} parent=11 // pred_region
          _
        $region16: #{tpu_custom_call.1} parent=11 // pred_fallthru
          _
        // Predicated region
        $region17: #{tpu_custom_call.1} parent=11 // pred_check
          %p148 = pneg %p57
        $region18: #{tpu_custom_call.1} parent=11 // pred_check_branch
          %150 = sbr.rel (%p148) target = $region20
        $region19: #{tpu_custom_call.1} parent=11 // pred_region
          %s152 = ssub.s32 4096, 4096
          %153 = vsyncadd [#allocation3], %s152
          %s154 = sshll.u32 [#allocation2], 4
          %s155 = int_to_ptr.vmem [resolvable:$true] %s154
          %160 = dma.hbm_to_vmem [thread:$0]  %s1, 4096, %s155, [#allocation3], 128, 128, 8
        $region20: #{tpu_custom_call.1} parent=11 // pred_fallthru
          _
        // Predicated region
        $region21: #{tpu_custom_call.1} parent=11 // pred_check
          %p161 = pneg %p78
        $region22: #{tpu_custom_call.1} parent=11 // pred_check_branch
          %163 = sbr.rel (%p161) target = $region24
        $region23: #{tpu_custom_call.1} parent=11 // pred_region
          %s165 = ssub.s32 1024, 1024
          %166 = vsyncadd [#allocation6], %s165
          %s167 = sshll.u32 [#allocation5], 4
          %s168 = int_to_ptr.vmem [resolvable:$true] %s167
          %173 = dma.hbm_to_vmem [thread:$0]  %s2, 1024, %s168, [#allocation6], 128, 128, 8
        $region24: #{tpu_custom_call.1} parent=11 // pred_fallthru
          _
      $region12: #{tpu_custom_call.1} parent=5 // pred_fallthru
        _
      %p174 = scmp.lt.s32.totalorder %s15, 2
      // Predicated region
      $region25: #{tpu_custom_call.1} parent=5 // pred_check
        %p175 = pneg %p174
      $region26: #{tpu_custom_call.1} parent=5 // pred_check_branch
        %177 = sbr.rel (%p175) target = $region28
      $region27: #{tpu_custom_call.1} parent=5 // pred_region
        // Predicated region
        $region29: #{tpu_custom_call.1} parent=27 // pred_check
          %p178 = pneg %p98
        $region30: #{tpu_custom_call.1} parent=27 // pred_check_branch
          %180 = sbr.rel (%p178) target = $region32
        $region31: #{tpu_custom_call.1} parent=27 // pred_region
          %s181 = sand.u32 %s15, 1
          %s182 = scalar_lea.sflag [#allocation3], %s181
          %s183 = sand.u32 %s88, 1
          %s184 = smul.addr %s183, 64
          %s185 = scalar_lea.vmem [#allocation7], %s184
          %s187 = ssub.s32 1024, 1024
          %188 = vsyncadd %s182, %s187
          %s189 = smul.addr %s15, 64
          %s190 = scalar_lea.hbm %s3, %s189
          %s191 = sshll.u32 %s185, 4
          %s192 = int_to_ptr.vmem [resolvable:$true] %s191
          %197 = dma.hbm_to_vmem [thread:$0]  %s190, 1024, %s192, %s182, 128, 64, 4
        $region32: #{tpu_custom_call.1} parent=27 // pred_fallthru
          _
      $region28: #{tpu_custom_call.1} parent=5 // pred_fallthru
        _
      %p198 = scmp.le.s32.totalorder 1, %s15
      %p199 = scmp.lt.s32.totalorder %s15, 3
      %p200 = pnand %p198, %p199
      %p201 = pneg %p200
      // Predicated region
      $region33: #{tpu_custom_call.1} parent=5 // pred_check
        _
      $region34: #{tpu_custom_call.1} parent=5 // pred_check_branch
        %203 = sbr.rel (%p200) target = $region36
      $region35: #{tpu_custom_call.1} parent=5 // pred_region
        %s204 = ssub.s32 %s15, 1
        // Predicated region
        $region37: #{tpu_custom_call.1} parent=35 // pred_check
          %p205 = pneg %p57
        $region38: #{tpu_custom_call.1} parent=35 // pred_check_branch
          %207 = sbr.rel (%p205) target = $region40
        $region39: #{tpu_custom_call.1} parent=35 // pred_region
          %208 = dma.done [#allocation3], 4096
        $region40: #{tpu_custom_call.1} parent=35 // pred_fallthru
          _
        // Predicated region
        $region41: #{tpu_custom_call.1} parent=35 // pred_check
          %p209 = pneg %p78
        $region42: #{tpu_custom_call.1} parent=35 // pred_check_branch
          %211 = sbr.rel (%p209) target = $region44
        $region43: #{tpu_custom_call.1} parent=35 // pred_region
          %212 = dma.done [#allocation6], 1024
        $region44: #{tpu_custom_call.1} parent=35 // pred_fallthru
          _
        %s213 = sand.u32 %s20, 1
        %s214 = scalar_lea.sflag [#allocation3], %s213
        %s215 = sand.u32 %s91, 1
        %s216 = smul.addr %s215, 64
        %s217 = scalar_lea.vmem [#allocation7], %s216
        // Predicated region
        $region45: #{tpu_custom_call.1} parent=35 // pred_check
          %p218 = pneg %p104
        $region46: #{tpu_custom_call.1} parent=35 // pred_check_branch
          %220 = sbr.rel (%p218) target = $region48
        $region47: #{tpu_custom_call.1} parent=35 // pred_region
          %221 = dma.done %s214, 1024
        $region48: #{tpu_custom_call.1} parent=35 // pred_fallthru
          _
        %p222 = pneg %p36
        %p223 = pneg %p33
        %p224 = pneg %p57
        %p225 = pneg %p54
        %p226 = pneg %p78
        %p227 = pneg %p75
        %s228 = sand.u32 %s20, 1
        %s229 = scalar_lea.sflag [#allocation3], %s228
        %s230 = sand.u32 %s91, 1
        %s231 = smul.addr %s230, 64
        %s232 = scalar_lea.vmem [#allocation7], %s231
        %p233 = pneg %p104
        %p234 = pneg %p101
        %p235 = pneg %p130
        %p236 = pneg %p127
        %s237 = sand.u32 %s117, 1
        %s238 = scalar_lea.sflag [#allocation4], %s237
        %s239 = sand.u32 %s117, 1
        %s240 = smul.addr %s239, 16
        %s241 = scalar_lea.vmem [#allocation8], %s240
        %v243 = vld [vmem:[%s0] sm:$0xff]
        %v244 = vld [vmem:[%s0 + $0x8] sm:$0xff]
        %vm245 = vcmp.gt.s32.totalorder %v243, 0
        %v246 = vsel %vm245, %v243, 0
        %vm247 = vcmp.gt.s32.totalorder %v244, 0
        %v248 = vsel %vm247, %v244, 0
        %vm249 = vcmp.lt.s32.totalorder %v246, 255
        %v250 = vsel %vm249, %v246, 255
        %vm251 = vcmp.lt.s32.totalorder %v248, 255
        %v252 = vsel %vm251, %v248, 255
        %v253 = vlaneseq
        %v254 = vand.u32 %v253, 127
        %v255 = vadd.s32 %v254, 128
        %256 = vset.pattern.permute.xlu0 0
        %257 = vperm.xlu0 %256, %v250
        %v258 = vpop.permute.xlu0 %257
        %259 = vset.pattern.permute.xlu0 0
        %260 = vperm.xlu0 %259, %v252
        %v261 = vpop.permute.xlu0 %260
        %vm262 = vcmp.eq.s32.totalorder %v254, %v258
        %vm263 = vcmp.eq.s32.totalorder %v255, %v258
        %vm264 = vcmp.eq.s32.totalorder %v254, %v261
        %vm265 = vcmp.eq.s32.totalorder %v255, %v261
        %v266 = vsel %vm262, 1, 0
        %v267 = vsel %vm263, 1, 0
        %v268 = vsel %vm264, 1, 0
        %v269 = vsel %vm265, 1, 0
        %v270 = vcvt.s32.f32 %v266
        %v271 = vcvt.s32.f32 %v267
        %v272 = vcvt.s32.f32 %v268
        %v273 = vcvt.s32.f32 %v269
        %v274 = vpack.c.bf16 %v272, %v270
        %v275 = vpack.c.bf16 %v273, %v271
        %v276 = vld [vmem:[#allocation2] sm:$0xff]
        %v277 = vld [vmem:[#allocation2 + $0x8] sm:$0xff]
        %v278 = vld [vmem:[#allocation2 + $0x10] sm:$0xff]
        %v279 = vld [vmem:[#allocation2 + $0x18] sm:$0xff]
        %v280 = vld [vmem:[#allocation2 + $0x20] sm:$0xff]
        %v281 = vld [vmem:[#allocation2 + $0x28] sm:$0xff]
        %v282 = vld [vmem:[#allocation2 + $0x30] sm:$0xff]
        %v283 = vld [vmem:[#allocation2 + $0x38] sm:$0xff]
        %v284 = vld [vmem:[#allocation2 + $0x40] sm:$0xff]
        %v285 = vld [vmem:[#allocation2 + $0x48] sm:$0xff]
        %v286 = vld [vmem:[#allocation2 + $0x50] sm:$0xff]
        %v287 = vld [vmem:[#allocation2 + $0x58] sm:$0xff]
        %v288 = vld [vmem:[#allocation2 + $0x60] sm:$0xff]
        %v289 = vld [vmem:[#allocation2 + $0x68] sm:$0xff]
        %v290 = vld [vmem:[#allocation2 + $0x70] sm:$0xff]
        %v291 = vld [vmem:[#allocation2 + $0x78] sm:$0xff]
        %v292 = vld [vmem:[#allocation2 + $0x80] sm:$0xff]
        %v293 = vld [vmem:[#allocation2 + $0x88] sm:$0xff]
        %v294 = vld [vmem:[#allocation2 + $0x90] sm:$0xff]
        %v295 = vld [vmem:[#allocation2 + $0x98] sm:$0xff]
        %v296 = vld [vmem:[#allocation2 + $0xa0] sm:$0xff]
        %v297 = vld [vmem:[#allocation2 + $0xa8] sm:$0xff]
        %v298 = vld [vmem:[#allocation2 + $0xb0] sm:$0xff]
        %v299 = vld [vmem:[#allocation2 + $0xb8] sm:$0xff]
        %v300 = vld [vmem:[#allocation2 + $0xc0] sm:$0xff]
        %v301 = vld [vmem:[#allocation2 + $0xc8] sm:$0xff]
        %v302 = vld [vmem:[#allocation2 + $0xd0] sm:$0xff]
        %v303 = vld [vmem:[#allocation2 + $0xd8] sm:$0xff]
        %v304 = vld [vmem:[#allocation2 + $0xe0] sm:$0xff]
        %v305 = vld [vmem:[#allocation2 + $0xe8] sm:$0xff]
        %v306 = vld [vmem:[#allocation2 + $0xf0] sm:$0xff]
        %v307 = vld [vmem:[#allocation2 + $0xf8] sm:$0xff]
        %v308 = vpack.c.bf16 %v277, %v276
        %v309 = vpack.c.bf16 %v279, %v278
        %v310 = vpack.c.bf16 %v281, %v280
        %v311 = vpack.c.bf16 %v283, %v282
        %v312 = vpack.c.bf16 %v285, %v284
        %v313 = vpack.c.bf16 %v287, %v286
        %v314 = vpack.c.bf16 %v289, %v288
        %v315 = vpack.c.bf16 %v291, %v290
        %v316 = vpack.c.bf16 %v293, %v292
        %v317 = vpack.c.bf16 %v295, %v294
        %v318 = vpack.c.bf16 %v297, %v296
        %v319 = vpack.c.bf16 %v299, %v298
        %v320 = vpack.c.bf16 %v301, %v300
        %v321 = vpack.c.bf16 %v303, %v302
        %v322 = vpack.c.bf16 %v305, %v304
        %v323 = vpack.c.bf16 %v307, %v306
        %v324 = vld [vmem:[#allocation5] sm:$0xff]
        %325 = vmatprep.subr.bf16.mxu0 0
        %326 = vmatpush1.bf16.msra.mxu0 %v308
        %327 = vmatprep.subr.bf16.mxu0 0
        %328 = vmatpush1.bf16.msra.mxu0 %v309
        %329 = vmatprep.subr.bf16.mxu0 0
        %330 = vmatpush1.bf16.msra.mxu0 %v310
        %331 = vmatprep.subr.bf16.mxu0 0
        %332 = vmatpush1.bf16.msra.mxu0 %v311
        %333 = vmatprep.subr.bf16.mxu0 0
        %334 = vmatpush1.bf16.msra.mxu0 %v312
        %335 = vmatprep.subr.bf16.mxu0 0
        %336 = vmatpush1.bf16.msra.mxu0 %v313
        %337 = vmatprep.subr.bf16.mxu0 0
        %338 = vmatpush1.bf16.msra.mxu0 %v314
        %339 = vmatprep.subr.bf16.mxu0 0
        %340 = vmatpush1.bf16.msra.mxu0 %v315
        %341 = vmatprep.subr.bf16.mxu0 0
        %342 = vmatpush1.bf16.msra.mxu0 %v316
        %343 = vmatprep.subr.bf16.mxu0 0
        %344 = vmatpush1.bf16.msra.mxu0 %v317
        %345 = vmatprep.subr.bf16.mxu0 0
        %346 = vmatpush1.bf16.msra.mxu0 %v318
        %347 = vmatprep.subr.bf16.mxu0 0
        %348 = vmatpush1.bf16.msra.mxu0 %v319
        %349 = vmatprep.subr.bf16.mxu0 0
        %350 = vmatpush1.bf16.msra.mxu0 %v320
        %351 = vmatprep.subr.bf16.mxu0 0
        %352 = vmatpush1.bf16.msra.mxu0 %v321
        %353 = vmatprep.subr.bf16.mxu0 0
        %354 = vmatpush1.bf16.msra.mxu0 %v322
        %355 = vmatprep.subr.bf16.mxu0 0
        %356 = vmatpush1.bf16.msra.mxu0 %v323
        %357 = vmatprep.mubr.bf16.mxu0 %v275
        %358 = vmatmul.mubr.bf16.gmra.mrb[0].mxu0 %v274
        %v359 = vpop.f32.mrb[0].mxu0
        %v360 = vadd.f32 %v324, %v359
        %v361 = vpop.f32.mrb[0].mxu0
        %v362 = vpop.f32.mrb[0].mxu0
        %v363 = vadd.f32 %v324, %v362
        %v364 = vpop.f32.mrb[0].mxu0
        %365 = vdwg.mxu0
        %v366 = vpack.c.bf16 %v363, %v360
        %v367 = vld [vmem:[%s217] sm:$0xf]
        %v368 = vld [vmem:[%s217 + $0x4] sm:$0xf]
        %v369 = vld [vmem:[%s217 + $0x8] sm:$0xf]
        %v370 = vld [vmem:[%s217 + $0xc] sm:$0xf]
        %v371 = vld [vmem:[%s217 + $0x10] sm:$0xf]
        %v372 = vld [vmem:[%s217 + $0x14] sm:$0xf]
        %v373 = vld [vmem:[%s217 + $0x18] sm:$0xf]
        %v374 = vld [vmem:[%s217 + $0x1c] sm:$0xf]
        %v375 = vld [vmem:[%s217 + $0x20] sm:$0xf]
        %v376 = vld [vmem:[%s217 + $0x24] sm:$0xf]
        %v377 = vld [vmem:[%s217 + $0x28] sm:$0xf]
        %v378 = vld [vmem:[%s217 + $0x2c] sm:$0xf]
        %v379 = vld [vmem:[%s217 + $0x30] sm:$0xf]
        %v380 = vld [vmem:[%s217 + $0x34] sm:$0xf]
        %v381 = vld [vmem:[%s217 + $0x38] sm:$0xf]
        %v382 = vld [vmem:[%s217 + $0x3c] sm:$0xf]
        %v399 = vunpack.c.l.b16 %v367
        %v400 = vunpack.c.l.b16 %v368
        %v401 = vunpack.c.l.b16 %v369
        %v402 = vunpack.c.l.b16 %v370
        %v403 = vunpack.c.l.b16 %v371
        %v404 = vunpack.c.l.b16 %v372
        %v405 = vunpack.c.l.b16 %v373
        %v406 = vunpack.c.l.b16 %v374
        %v407 = vunpack.c.l.b16 %v375
        %v408 = vunpack.c.l.b16 %v376
        %v409 = vunpack.c.l.b16 %v377
        %v410 = vunpack.c.l.b16 %v378
        %v411 = vunpack.c.l.b16 %v379
        %v412 = vunpack.c.l.b16 %v380
        %v413 = vunpack.c.l.b16 %v381
        %v414 = vunpack.c.l.b16 %v382
        %v415 = vpack.c.b16 %v400, %v399
        %v416 = vpack.c.b16 %v402, %v401
        %v417 = vpack.c.b16 %v404, %v403
        %v418 = vpack.c.b16 %v406, %v405
        %v419 = vpack.c.b16 %v408, %v407
        %v420 = vpack.c.b16 %v410, %v409
        %v421 = vpack.c.b16 %v412, %v411
        %v422 = vpack.c.b16 %v414, %v413
        %431 = vmatprep.subr.bf16.mxu0 0
        %432 = vmatpush1.bf16.msra.mxu0 %v415
        %433 = vmatprep.subr.bf16.mxu0 0
        %434 = vmatpush1.bf16.msra.mxu0 %v416
        %435 = vmatprep.subr.bf16.mxu0 0
        %436 = vmatpush1.bf16.msra.mxu0 %v417
        %437 = vmatprep.subr.bf16.mxu0 0
        %438 = vmatpush1.bf16.msra.mxu0 %v418
        %439 = vmatprep.subr.bf16.mxu0 0
        %440 = vmatpush1.bf16.msra.mxu0 %v419
        %441 = vmatprep.subr.bf16.mxu0 0
        %442 = vmatpush1.bf16.msra.mxu0 %v420
        %443 = vmatprep.subr.bf16.mxu0 0
        %444 = vmatpush1.bf16.msra.mxu0 %v421
        %445 = vmatprep.subr.bf16.mxu0 0
        %446 = vmatpush1.bf16.msra.mxu0 %v422
        %447 = vmatprep.subr.bf16.mxu0 0
        %448 = vmatpush1.bf16.msra.mxu0 0
        %449 = vmatprep.subr.bf16.mxu0 0
        %450 = vmatpush1.bf16.msra.mxu0 0
        %451 = vmatprep.subr.bf16.mxu0 0
        %452 = vmatpush1.bf16.msra.mxu0 0
        %453 = vmatprep.subr.bf16.mxu0 0
        %454 = vmatpush1.bf16.msra.mxu0 0
        %455 = vmatprep.subr.bf16.mxu0 0
        %456 = vmatpush1.bf16.msra.mxu0 0
        %457 = vmatprep.subr.bf16.mxu0 0
        %458 = vmatpush1.bf16.msra.mxu0 0
        %459 = vmatprep.subr.bf16.mxu0 0
        %460 = vmatpush1.bf16.msra.mxu0 0
        %461 = vmatprep.subr.bf16.mxu0 0
        %462 = vmatpush1.bf16.msra.mxu0 0
        %463 = vmatprep.mubr.bf16.mxu0 0
        %464 = vmatmul.mubr.bf16.gmra.mrb[0].mxu0 %v366
        %v465 = vpop.f32.mrb[0].mxu0
        %v466 = vadd.f32 0.0, %v465
        %v467 = vpop.f32.mrb[0].mxu0
        %v468 = vpop.f32.mrb[0].mxu0
        %v469 = vadd.f32 0.0, %v468
        %v470 = vpop.f32.mrb[0].mxu0
        %471 = vdwg.mxu0
        %472 = vst [vmem:[%s241] sm:$0xff] %v466
        %473 = vst [vmem:[%s241 + $0x8] sm:$0xff] %v469
        %s474 = sand.u32 %s117, 1
        %s475 = scalar_lea.sflag [#allocation4], %s474
        %s476 = sand.u32 %s117, 1
        %s477 = smul.addr %s476, 16
        %s478 = scalar_lea.vmem [#allocation8], %s477
        // Predicated region
        $region49: #{tpu_custom_call.1} parent=35 // pred_check
          %p479 = pneg %p127
        $region50: #{tpu_custom_call.1} parent=35 // pred_check_branch
          %481 = sbr.rel (%p479) target = $region52
        $region51: #{tpu_custom_call.1} parent=35 // pred_region
          %s483 = ssub.s32 256, 256
          %484 = vsyncadd %s475, %s483
          %s485 = smul.addr %s20, 128
          %s486 = scalar_lea.hbm %s4, %s485
          %s487 = sshll.u32 %s478, 4
          %s488 = int_to_ptr.vmem [resolvable:$true] %s487
          %493 = dma.vmem_to_hbm [thread:$0]  %s488, 256, %s486, %s475, 128, 256, 8
        $region52: #{tpu_custom_call.1} parent=35 // pred_fallthru
          _
      $region36: #{tpu_custom_call.1} parent=5 // pred_fallthru
        _
      %p494 = scmp.le.s32.totalorder 2, %s15
      // Predicated region
      $region53: #{tpu_custom_call.1} parent=5 // pred_check
        %p495 = pneg %p494
      $region54: #{tpu_custom_call.1} parent=5 // pred_check_branch
        %497 = sbr.rel (%p495) target = $region56
      $region55: #{tpu_custom_call.1} parent=5 // pred_region
        %s498 = ssub.s32 %s15, 2
        // Predicated region
        $region57: #{tpu_custom_call.1} parent=55 // pred_check
          %p499 = pneg %p133
        $region58: #{tpu_custom_call.1} parent=55 // pred_check_branch
          %501 = sbr.rel (%p499) target = $region60
        $region59: #{tpu_custom_call.1} parent=55 // pred_region
          %s502 = sand.u32 %s118, 1
          %s503 = scalar_lea.sflag [#allocation4], %s502
          %s504 = sand.u32 %s118, 1
          %s505 = smul.addr %s504, 16
          %s506 = scalar_lea.vmem [#allocation8], %s505
          %507 = dma.done %s503, 256
        $region60: #{tpu_custom_call.1} parent=55 // pred_fallthru
          _
      $region56: #{tpu_custom_call.1} parent=5 // pred_fallthru
        _
    $region6: #{tpu_custom_call.1} parent=1 // loop_footer
      %s19 = sadd.s32 1, %s15
    $region7: #{tpu_custom_call.1} parent=1 // loop_footer_branch
      %14 = sbr.rel target = $region3
    $region8: #{tpu_custom_call.1} parent=1 // loop_exit
      _
    %508 = vsyncpa [#allocation3], 1
    %s509 = scalar_lea.sflag [#allocation3], 1
    %510 = vsyncpa %s509, 1
    %511 = vsyncpa [#allocation6], 1
    %512 = vsyncpa [#allocation4], 1
    %s513 = scalar_lea.sflag [#allocation4], 1
    %514 = vsyncpa %s513, 1

</llo_original>
